<compile_context>
chip_gen: v7x
topology: tpu7x:2x2x1
jax: 0.10.0
libtpu: 0.0.40
codegen_flags: <defaults>
</compile_context>

<pallas_src>
import jax
import jax.numpy as jnp
from jax.experimental import pallas as pl
from jax.experimental.pallas import tpu as pltpu

INPUT_DIM = 115
OUTPUT_DIM = 3

SUBLANE = 8        # f32 sublane granule (second-to-last dim)
PAD_OUT = 8        # padded output / weight-column width (columns 3..7 are zero)
MAX_TILE_B = 2048  # x block ~1 MiB after lane padding; double-buffered stays tiny


def _cdiv(a, b):
    return (a + b - 1) // b


def _round_up(x, m):
    return _cdiv(x, m) * m


def _tile_and_grid(batch):
    """Sublane-aligned batch tile; balanced >=2-step grid once B > 16 (v7x megacore)."""
    if batch <= 2 * SUBLANE:
        tile_b = _round_up(batch, SUBLANE)
    else:
        # At least 2 steps; more if a single step would exceed MAX_TILE_B rows.
        grid_target = max(2, _cdiv(batch, MAX_TILE_B))
        tile_b = _round_up(_cdiv(batch, grid_target), SUBLANE)
    return tile_b, _cdiv(batch, tile_b)


def _linear_kernel(x_ref, w_ref, b_ref, o_ref):
    # x_ref: (tile_b, INPUT_DIM)   w_ref: (INPUT_DIM, PAD_OUT)
    # b_ref: (1, PAD_OUT)          o_ref: (tile_b, PAD_OUT)
    o_ref[...] = (
        jnp.dot(x_ref[...], w_ref[...], preferred_element_type=jnp.float32)
        + b_ref[...]
    ).astype(o_ref.dtype)


@jax.jit
def logistic_regression_forward(x, weight, bias):
    """Forward pass of the PyTorch LogisticRegression module (logits only).

    Args:
      x:      (B, INPUT_DIM) float32
      weight: (OUTPUT_DIM, INPUT_DIM) float32  (PyTorch nn.Linear layout)
      bias:   (OUTPUT_DIM,) float32
    Returns:
      (B, OUTPUT_DIM) float32
    """
    B = x.shape[0]
    tile_b, grid_b = _tile_and_grid(B)

    # Only the tiny weight/bias operands are padded (a few KiB); x streams
    # directly from its original HBM buffer. Padded columns are exactly zero.
    w_p = (
        jnp.zeros((INPUT_DIM, PAD_OUT), jnp.float32)
        .at[:, :OUTPUT_DIM]
        .set(weight.T)
    )
    b_p = jnp.zeros((1, PAD_OUT), jnp.float32).at[0, :OUTPUT_DIM].set(bias)

    b_eff = tile_b * grid_b  # rows actually streamed (including masked tail block)
    cost = pl.CostEstimate(
        flops=2 * b_eff * INPUT_DIM * PAD_OUT,
        transcendentals=0,
        bytes_accessed=4
        * (
            b_eff * INPUT_DIM          # read x (dominant)
            + INPUT_DIM * PAD_OUT      # read W (resident, read once)
            + PAD_OUT                  # read b
            + b_eff * PAD_OUT          # write out (narrow)
        ),
    )

    out = pl.pallas_call(
        _linear_kernel,
        out_shape=jax.ShapeDtypeStruct((B, PAD_OUT), jnp.float32),
        grid=(grid_b,),
        in_specs=[
            pl.BlockSpec((tile_b, INPUT_DIM), lambda i: (i, 0)),   # x: tiled over batch
            pl.BlockSpec((INPUT_DIM, PAD_OUT), lambda i: (0, 0)),  # W^T: resident in VMEM
            pl.BlockSpec((1, PAD_OUT), lambda i: (0, 0)),          # b: resident in VMEM
        ],
        out_specs=pl.BlockSpec((tile_b, PAD_OUT), lambda i: (i, 0)),
        compiler_params=pltpu.CompilerParams(
            dimension_semantics=("parallel",),  # batch tiles are independent
        ),
        cost_estimate=cost,
    )(x, w_p, b_p)

    # Drop the zero-padded output columns (tiny: 32 B/row).
    return out[:, :OUTPUT_DIM]


def init_params(key):
    """Deterministic init mimicking PyTorch nn.Linear default (U(-k, k), k=1/sqrt(fan_in))."""
    kw, kb = jax.random.split(key)
    bound = 1.0 / jnp.sqrt(jnp.float32(INPUT_DIM))
    weight = jax.random.uniform(
        kw, (OUTPUT_DIM, INPUT_DIM), jnp.float32, minval=-bound, maxval=bound
    )
    bias = jax.random.uniform(
        kb, (OUTPUT_DIM,), jnp.float32, minval=-bound, maxval=bound
    )
    # TODO(synk): bn1 (BatchNorm1d) parameters exist in the PyTorch module but are
    # never used in forward(), so they are intentionally omitted.
    return weight, bias


if __name__ == "__main__":
    key = jax.random.PRNGKey(0)
    k_x, k_p = jax.random.split(key)

    weight, bias = init_params(k_p)

    # Small batch: single-tile path (tile_b = 8, grid = 1).
    batch = 8
    x = jax.random.normal(k_x, (batch, INPUT_DIM), jnp.float32)
    out = logistic_regression_forward(x, weight, bias)
    out = jax.block_until_ready(out)
    ref = x @ weight.T + bias
    assert out.shape == (batch, OUTPUT_DIM)
    assert jnp.allclose(out, ref, atol=1e-5, rtol=1e-5)

    # Batch not a multiple of 8: exercises the balanced 2-step grid with a
    # masked partial final block (no batch rounding to a full tile).
    batch2 = 300
    x2 = jax.random.normal(k_x, (batch2, INPUT_DIM), jnp.float32)
    out2 = logistic_regression_forward(x2, weight, bias)
    out2 = jax.block_until_ready(out2)
    ref2 = x2 @ weight.T + bias
    assert out2.shape == (batch2, OUTPUT_DIM)
    assert jnp.allclose(out2, ref2, atol=1e-4, rtol=1e-4)

    print("KERNEL_OK")
</pallas_src>

<mosaic_0001>
module attributes {stable_mosaic.version = 11 : i64} {
  func.func @_linear_kernel(%arg0: i32, %arg1: memref<8x115xf32, #tpu.memory_space<vmem>>, %arg2: memref<115x8xf32, #tpu.memory_space<vmem>>, %arg3: memref<1x8xf32, #tpu.memory_space<vmem>>, %arg4: memref<8x8xf32, #tpu.memory_space<vmem>>) attributes {dimension_semantics = [#tpu.dimension_semantics<parallel>], iteration_bounds = array<i64: 1>, scalar_prefetch = 0 : i64, scratch_operands = 0 : i64, tpu.core_type = #tpu.core_type<tc>, window_params = [{transform_indices = @transform_0, window_bounds = array<i64: 8, 115>}, {pipeline_mode = #tpu.pipeline_mode<synchronous>, transform_indices = @transform_1, window_bounds = array<i64: 115, 8>}, {pipeline_mode = #tpu.pipeline_mode<synchronous>, transform_indices = @transform_2, window_bounds = array<i64: 1, 8>}, {transform_indices = @transform_3, window_bounds = array<i64: 8, 8>}]} {
    %c0 = arith.constant 0 : index
    %c0_0 = arith.constant 0 : index
    %0 = vector.load %arg1[%c0, %c0_0] : memref<8x115xf32, #tpu.memory_space<vmem>>, vector<8x115xf32>
    %c0_1 = arith.constant 0 : index
    %c0_2 = arith.constant 0 : index
    %1 = vector.load %arg2[%c0_1, %c0_2] : memref<115x8xf32, #tpu.memory_space<vmem>>, vector<115x8xf32>
    %cst = arith.constant dense<0.000000e+00> : vector<8x8xf32>
    %2 = tpu.matmul %0, %1, %cst {dimension_numbers = #tpu.dot_dimension_numbers<[1], [0], [0], [1], [0, 0, 1, 1], [], []>} : vector<8x115xf32>, vector<115x8xf32>, vector<8x8xf32> -> vector<8x8xf32>
    %c0_3 = arith.constant 0 : index
    %c0_4 = arith.constant 0 : index
    %3 = vector.load %arg3[%c0_3, %c0_4] : memref<1x8xf32, #tpu.memory_space<vmem>>, vector<1x8xf32>
    %4 = vector.broadcast %3 : vector<1x8xf32> to vector<8x8xf32>
    %5 = arith.addf %2, %4 : vector<8x8xf32>
    %c0_5 = arith.constant 0 : index
    %c0_6 = arith.constant 0 : index
    %6 = vector.load %arg4[%c0_5, %c0_6] : memref<8x8xf32, #tpu.memory_space<vmem>>, vector<8x8xf32>
    tpu.vector_store %arg4[%c0_5, %c0_6], %5 {strides = array<i32>} : memref<8x8xf32, #tpu.memory_space<vmem>>, vector<8x8xf32>,
    return
  }
  func.func @transform_0(%arg0: i32) -> (i32, i32) {
    %c0_i32 = arith.constant 0 : i32
    %c0_i32_0 = arith.constant 0 : i32
    return %arg0, %c0_i32 : i32, i32
  }
  func.func @transform_1(%arg0: i32) -> (i32, i32) {
    %c0_i32 = arith.constant 0 : i32
    %c0_i32_0 = arith.constant 0 : i32
    %c0_i32_1 = arith.constant 0 : i32
    return %c0_i32, %c0_i32_0 : i32, i32
  }
  func.func @transform_2(%arg0: i32) -> (i32, i32) {
    %c0_i32 = arith.constant 0 : i32
    %c0_i32_0 = arith.constant 0 : i32
    %c0_i32_1 = arith.constant 0 : i32
    return %c0_i32, %c0_i32_0 : i32, i32
  }
  func.func @transform_3(%arg0: i32) -> (i32, i32) {
    %c0_i32 = arith.constant 0 : i32
    %c0_i32_0 = arith.constant 0 : i32
    return %arg0, %c0_i32 : i32, i32
  }
}

</mosaic_0001>

<llo_original>
// kernel: logistic_regression_forward.1
$region0: #{logistic_regression_forward.1}
  #allocation0 [shape = 'u32[]', space=smem, size = 0x4, offset = 0x4, fixed_abs, tag = 'smem constant byte address 0x4 - core index']
  #allocation1 [shape = 'u32[144,128]{1,0:T(1,128)}', space=vmem, size = 0x12000, scoped, tag = 'internal scratch']
  %s0 = inlined_call_operand.vmem [shape: f32[8,115], index: 0, kind: input, shape index: {}]
  %s1 = inlined_call_operand.vmem [shape: f32[115,8], index: 1, kind: input, shape index: {}]
  %s2 = inlined_call_operand.vmem [shape: f32[1,8], index: 2, kind: input, shape index: {}]
  %s3 = inlined_call_operand.vmem [shape: f32[8,8], index: 3, kind: output, shape index: {}]
  %s4 = sld [smem:[#allocation0]]
  $region22: #{logistic_regression_forward.1} parent=0
    _
  %s6 = ssub.s32 1, %s4
  %s7 = scalar_select 0, %s6, %s4
  // Predicated region
  $region2: #{logistic_regression_forward.1} parent=0 // pred_check
    _
  $region3: #{logistic_regression_forward.1} parent=0 // pred_check_branch
    %9 = sbr.rel (0) target = $region5
  $region4: #{logistic_regression_forward.1} parent=0 // pred_region
    _
  $region5: #{logistic_regression_forward.1} parent=0 // pred_fallthru
    _
  // Predicated region
  $region6: #{logistic_regression_forward.1} parent=0 // pred_check
    _
  $region7: #{logistic_regression_forward.1} parent=0 // pred_check_branch
    %11 = sbr.rel (0) target = $region9
  $region8: #{logistic_regression_forward.1} parent=0 // pred_region
    _
  $region9: #{logistic_regression_forward.1} parent=0 // pred_fallthru
    _
  // Predicated region
  $region10: #{logistic_regression_forward.1} parent=0 // pred_check
    _
  $region11: #{logistic_regression_forward.1} parent=0 // pred_check_branch
    %13 = sbr.rel (0) target = $region13
  $region12: #{logistic_regression_forward.1} parent=0 // pred_region
    _
  $region13: #{logistic_regression_forward.1} parent=0 // pred_fallthru
    _
  %v14 = vld [vmem:[%s0] sm:$0xff]
  %v15 = vld [vmem:[%s1] sm:$0xff]
  %v16 = vld [vmem:[%s1 + $0x8] sm:$0xff]
  %v17 = vld [vmem:[%s1 + $0x10] sm:$0xff]
  %v18 = vld [vmem:[%s1 + $0x18] sm:$0xff]
  %v19 = vld [vmem:[%s1 + $0x20] sm:$0xff]
  %v20 = vld [vmem:[%s1 + $0x28] sm:$0xff]
  %v21 = vld [vmem:[%s1 + $0x30] sm:$0xff]
  %v22 = vld [vmem:[%s1 + $0x38] sm:$0xff]
  %v23 = vld [vmem:[%s1 + $0x40] sm:$0xff]
  %v24 = vld [vmem:[%s1 + $0x48] sm:$0xff]
  %v25 = vld [vmem:[%s1 + $0x50] sm:$0xff]
  %v26 = vld [vmem:[%s1 + $0x58] sm:$0xff]
  %v27 = vld [vmem:[%s1 + $0x60] sm:$0xff]
  %v28 = vld [vmem:[%s1 + $0x68] sm:$0xff]
  %v29 = vld [vmem:[%s1 + $0x70] sm:$0x7]
  %v30 = vld [vmem:[%s2] sm:$0x1]
  %v32 = vlaneseq
  %v33 = vshrl.u32 %v32, 7
  %v34 = vsub.s32 0, %v33
  %v35 = vrot.slane %v30, %v34
  %vm37 = vcmask 941056
  %v39 = vsel %vm37, %v14, 0
  %vm41 = vcmask 1042432
  %v43 = vsel %vm41, %v29, 0
  %45 = vmatprep.subr.mxu0 0.0
  %46 = vmatpush1.msra.mxu0 %v15
  %47 = vmatprep.subr.mxu0 0.0
  %48 = vmatpush1.msra.mxu0 %v16
  %49 = vmatprep.subr.mxu0 0.0
  %50 = vmatpush1.msra.mxu0 %v17
  %51 = vmatprep.subr.mxu0 0.0
  %52 = vmatpush1.msra.mxu0 %v18
  %53 = vmatprep.subr.mxu0 0.0
  %54 = vmatpush1.msra.mxu0 %v19
  %55 = vmatprep.subr.mxu0 0.0
  %56 = vmatpush1.msra.mxu0 %v20
  %57 = vmatprep.subr.mxu0 0.0
  %58 = vmatpush1.msra.mxu0 %v21
  %59 = vmatprep.subr.mxu0 0.0
  %60 = vmatpush1.msra.mxu0 %v22
  %61 = vmatprep.subr.mxu0 0.0
  %62 = vmatpush1.msra.mxu0 %v23
  %63 = vmatprep.subr.mxu0 0.0
  %64 = vmatpush1.msra.mxu0 %v24
  %65 = vmatprep.subr.mxu0 0.0
  %66 = vmatpush1.msra.mxu0 %v25
  %67 = vmatprep.subr.mxu0 0.0
  %68 = vmatpush1.msra.mxu0 %v26
  %69 = vmatprep.subr.mxu0 0.0
  %70 = vmatpush1.msra.mxu0 %v27
  %71 = vmatprep.subr.mxu0 0.0
  %72 = vmatpush1.msra.mxu0 %v28
  %73 = vmatprep.subr.mxu0 0.0
  %74 = vmatpush1.msra.mxu0 %v43
  %75 = vmatprep.subr.mxu0 0.0
  %76 = vmatpush1.msra.mxu0 0.0
  %77 = vmatprep.subr.mxu0 0.0
  %78 = vmatpush1.msra.mxu0 0.0
  %79 = vmatprep.subr.mxu0 0.0
  %80 = vmatpush1.msra.mxu0 0.0
  %81 = vmatprep.subr.mxu0 0.0
  %82 = vmatpush1.msra.mxu0 0.0
  %83 = vmatprep.subr.mxu0 0.0
  %84 = vmatpush1.msra.mxu0 0.0
  %85 = vmatprep.subr.mxu0 0.0
  %86 = vmatpush1.msra.mxu0 0.0
  %87 = vmatprep.subr.mxu0 0.0
  %88 = vmatpush1.msra.mxu0 0.0
  %89 = vmatprep.subr.mxu0 0.0
  %90 = vmatpush1.msra.mxu0 0.0
  %91 = vmatprep.subr.mxu0 0.0
  %92 = vmatpush1.msra.mxu0 0.0
  %93 = vmatprep.subr.mxu0 0.0
  %94 = vmatpush1.msra.mxu0 0.0
  %95 = vmatprep.subr.mxu0 0.0
  %96 = vmatpush1.msra.mxu0 0.0
  %97 = vmatprep.subr.mxu0 0.0
  %98 = vmatpush1.msra.mxu0 0.0
  %99 = vmatprep.subr.mxu0 0.0
  %100 = vmatpush1.msra.mxu0 0.0
  %101 = vmatprep.subr.mxu0 0.0
  %102 = vmatpush1.msra.mxu0 0.0
  %103 = vmatprep.subr.mxu0 0.0
  %104 = vmatpush1.msra.mxu0 0.0
  %105 = vmatprep.subr.mxu0 0.0
  %106 = vmatpush1.msra.mxu0 0.0
  %107 = vmatprep.subr.mxu0 0.0
  %108 = vmatpush1.msra.mxu0 0.0
  %109 = vmatprep.mubr.f32.mxu0 0.0
  %110 = vmatmul.mubr.f32.gmra.mrb[0].mxu0 %v39
  %v111 = vpop.f32.mrb[0].mxu0
  %v112 = vadd.f32 %v35, %v111
  %v113 = vpop.f32.mrb[0].mxu0
  %114 = vdwg.mxu0
  %vm115 = vcmask 64512
  %116 = vst.msk [vmem:[%s3] sm:$0xff] %vm115, %v112
  // Predicated region
  $region14: #{logistic_regression_forward.1} parent=0 // pred_check
    _
  $region15: #{logistic_regression_forward.1} parent=0 // pred_check_branch
    %118 = sbr.rel (0) target = $region17
  $region16: #{logistic_regression_forward.1} parent=0 // pred_region
    _
  $region17: #{logistic_regression_forward.1} parent=0 // pred_fallthru
    _
  // Predicated region
  $region18: #{logistic_regression_forward.1} parent=0 // pred_check
    _
  $region19: #{logistic_regression_forward.1} parent=0 // pred_check_branch
    %120 = sbr.rel (0) target = $region21
  $region20: #{logistic_regression_forward.1} parent=0 // pred_region
    _
  $region21: #{logistic_regression_forward.1} parent=0 // pred_fallthru
    _

</llo_original>
